<compile_context>
chip_gen: v7x
topology: tpu7x:2x2x1
jax: 0.10.0
libtpu: 0.0.40
codegen_flags: <defaults>
</compile_context>

<pallas_src>
import numpy as np
import jax
import jax.numpy as jnp
from jax import lax
from jax.experimental import pallas as pl
from jax.experimental.pallas import tpu as pltpu

INPUT_SIZE = 32
HIDDEN = 64
MAX_CHILDREN = 4     # max fan-out supported by the kernel (padded with zero-slot)
SEQ_LEN = 8
BATCH = 2


# ----------------------------------------------------------------------------
# Pallas kernel: one grid step == one tree (batch column); nodes looped inside
# ----------------------------------------------------------------------------
def _tree_lstm_kernel(topo_ref, child_ref, nnodes_ref,        # SMEM scalar prefetch (flat)
                      emb_ref, wcat_ref, bcat_ref, wfh_ref,   # VMEM inputs
                      state_ref,                              # VMEM output (S+1, 2H): [c | h]
                      ch_scratch):                            # VMEM scratch (K, 2H)
    H = HIDDEN
    S = SEQ_LEN
    b = pl.program_id(0)

    # Hoisted weight/bias loads: read once per tree, reused for every node.
    W_cat = wcat_ref[...]      # (D+H, 4H)
    b_cat = bcat_ref[...]      # (1, 4H)
    W_fh = wfh_ref[...]        # (H, H)

    # Zero the whole state buffer; row S stays zero forever and is the
    # "missing child" padding slot.
    state_ref[...] = jnp.zeros_like(state_ref)

    base = b * S

    def body(n, carry):
        node = topo_ref[base + n]                             # token index of this node

        # Gather (padded) children states into a fixed VMEM scratch:
        # 4 lane-dense (1, 2H) row loads instead of 8 masked 64-lane loads.
        cbase = (base + n) * MAX_CHILDREN
        for k in range(MAX_CHILDREN):
            idx = child_ref[cbase + k]                        # == S for the zero slot
            ch_scratch[pl.ds(k, 1), :] = state_ref[pl.ds(idx, 1), :]
        ch = ch_scratch[...]                                  # (K, 2H)
        child_c = ch[:, :H]                                   # (K, H)
        child_h = ch[:, H:]                                   # (K, H)

        # child_h_sum = sum(child_h, dim=0, keepdim=True)
        h_sum = jnp.sum(child_h, axis=0, keepdims=True)       # (1, H)

        emb = emb_ref[pl.ds(node, 1), :]                      # (1, D)

        # Fused gate matmul: i | o | u | fx in one 256-wide MXU pass.
        xh = jnp.concatenate([emb, h_sum], axis=1)            # (1, D+H)
        g = jnp.dot(xh, W_cat, preferred_element_type=jnp.float32) + b_cat   # (1, 4H)

        i_g = jax.nn.sigmoid(g[:, :H])
        o_g = jax.nn.sigmoid(g[:, H:2 * H])
        u_g = jnp.tanh(g[:, 2 * H:3 * H])
        fx = g[:, 3 * H:]                                     # fx(emb) + b_fx + b_fh

        # f = fh(child_h) + fx(emb).repeat(K, 1)
        f = jnp.dot(child_h, W_fh, preferred_element_type=jnp.float32) + fx  # (K, H)
        fc = jax.nn.sigmoid(f) * child_c                      # zero-slot rows contribute 0
        c_new = i_g * u_g + jnp.sum(fc, axis=0, keepdims=True)
        h_new = o_g * jnp.tanh(c_new)

        # Lane-dense (1, 2H=128) unmasked store of [c | h].
        state_ref[pl.ds(node, 1), :] = jnp.concatenate([c_new, h_new], axis=1)
        return carry

    # Dynamic trip count per tree (no padded no-op nodes).
    lax.fori_loop(0, nnodes_ref[b], body, 0)


def tree_lstm_forward_pallas(topo_flat, child_flat, num_nodes, embeds_bsd,
                             W_cat, b_cat, W_fh):
    """One pallas_call for all batch columns. Returns packed states (B, S+1, 2H)."""
    B, S, D = embeds_bsd.shape
    H = HIDDEN

    grid_spec = pltpu.PrefetchScalarGridSpec(
        num_scalar_prefetch=3,
        grid=(B,),
        in_specs=[
            pl.BlockSpec((None, S, D), lambda b, *_: (b, 0, 0)),     # embeds (per column)
            pl.BlockSpec((D + H, 4 * H), lambda b, *_: (0, 0)),      # W_cat
            pl.BlockSpec((1, 4 * H), lambda b, *_: (0, 0)),          # b_cat
            pl.BlockSpec((H, H), lambda b, *_: (0, 0)),              # W_fh
        ],
        out_specs=pl.BlockSpec((None, S + 1, 2 * H), lambda b, *_: (b, 0, 0)),
        scratch_shapes=[pltpu.VMEM((MAX_CHILDREN, 2 * H), jnp.float32)],
    )

    fn = pl.pallas_call(
        _tree_lstm_kernel,
        grid_spec=grid_spec,
        out_shape=jax.ShapeDtypeStruct((B, S + 1, 2 * H), jnp.float32),
        compiler_params=pltpu.CompilerParams(dimension_semantics=("parallel",)),
    )
    return fn(topo_flat, child_flat, num_nodes, embeds_bsd, W_cat, b_cat, W_fh)


# ----------------------------------------------------------------------------
# Parameter setup (deterministic, synthetic) and glue
# ----------------------------------------------------------------------------
def init_module_params(key, input_size, hidden):
    ks = jax.random.split(key, 8)
    s = 0.1
    return dict(
        W_ioux=s * jax.random.normal(ks[0], (input_size, 3 * hidden), jnp.float32),
        b_ioux=s * jax.random.normal(ks[1], (3 * hidden,), jnp.float32),
        W_iouh=s * jax.random.normal(ks[2], (hidden, 3 * hidden), jnp.float32),
        b_iouh=s * jax.random.normal(ks[3], (3 * hidden,), jnp.float32),
        W_fx=s * jax.random.normal(ks[4], (input_size, hidden), jnp.float32),
        b_fx=s * jax.random.normal(ks[5], (hidden,), jnp.float32),
        W_fh=s * jax.random.normal(ks[6], (hidden, hidden), jnp.float32),
        b_fh=s * jax.random.normal(ks[7], (hidden,), jnp.float32),
    )


def build_fused_params(p, input_size, hidden):
    """W_cat = [[W_ioux, W_fx], [W_iouh, 0]] (D+H, 4H); b_cat (1, 4H); W_fh (H, H)."""
    D, H = input_size, hidden
    W_cat = jnp.zeros((D + H, 4 * H), jnp.float32)
    W_cat = W_cat.at[:D, :3 * H].set(p["W_ioux"])
    W_cat = W_cat.at[D:, :3 * H].set(p["W_iouh"])
    W_cat = W_cat.at[:D, 3 * H:].set(p["W_fx"])        # h_sum rows of the fx block stay 0
    b_cat = jnp.concatenate([p["b_ioux"] + p["b_iouh"],
                             p["b_fx"] + p["b_fh"]])[None, :]       # (1, 4H)
    return W_cat, b_cat, p["W_fh"]


def build_tree(parents):
    """parents[i] = 1-indexed parent of token i+1; 0 = root, -1 = not in tree."""
    n = len(parents)
    children = {i: [] for i in range(n)}
    root = None
    for i in range(n):
        p = int(parents[i])
        if p == -1:
            continue
        if p == 0:
            root = i
        else:
            children[p - 1].append(i)
    assert root is not None
    order = []

    def visit(i):
        for c in children[i]:
            visit(c)
        order.append(i)

    visit(root)
    return root, children, order


def child_sum_tree_lstm_forward(parses, embeds, fused_params):
    """Mirrors ChildSumTreeLSTM.forward: returns (states_c, states_h), each (1, B*H)."""
    W_cat, b_cat, W_fh = fused_params
    S, B, D = embeds.shape
    H = HIDDEN

    topo_flat = np.zeros((B * S,), dtype=np.int32)
    child_flat = np.full((B * S * MAX_CHILDREN,), S, dtype=np.int32)   # S == zero slot
    num_nodes = np.zeros((B,), dtype=np.int32)
    roots = []
    for j in range(B):
        root, children, order = build_tree(np.asarray(parses[:, j]))
        roots.append(root)
        num_nodes[j] = len(order)
        for r, node in enumerate(order):
            topo_flat[j * S + r] = node
            chs = children[node]
            assert len(chs) <= MAX_CHILDREN   # TODO(synk): chunk >4-ary nodes if ever needed
            for k, c in enumerate(chs):
                child_flat[(j * S + r) * MAX_CHILDREN + k] = c

    embeds_bsd = jnp.transpose(embeds, (1, 0, 2))          # (B, S, D)
    state = tree_lstm_forward_pallas(jnp.asarray(topo_flat), jnp.asarray(child_flat),
                                     jnp.asarray(num_nodes), embeds_bsd,
                                     W_cat, b_cat, W_fh)   # (B, S+1, 2H)

    states_c = jnp.concatenate([state[j, roots[j], :H][None, :] for j in range(B)], axis=1)
    states_h = jnp.concatenate([state[j, roots[j], H:][None, :] for j in range(B)], axis=1)
    return states_c, states_h


# ----------------------------------------------------------------------------
# Pure-JAX reference (mirrors the PyTorch code) for validation
# ----------------------------------------------------------------------------
def ref_node_forward(p, emb, child_c, child_h):
    child_h_sum = jnp.sum(child_h, axis=0, keepdims=True)
    iou = (emb[None, :] @ p["W_ioux"] + p["b_ioux"]
           + child_h_sum @ p["W_iouh"] + p["b_iouh"])
    i, o, u = jnp.split(iou, 3, axis=1)
    i, o, u = jax.nn.sigmoid(i), jax.nn.sigmoid(o), jnp.tanh(u)
    f = (child_h @ p["W_fh"] + p["b_fh"]
         + jnp.tile(emb[None, :] @ p["W_fx"] + p["b_fx"], (child_h.shape[0], 1)))
    fc = jax.nn.sigmoid(f) * child_c
    c = i * u + jnp.sum(fc, axis=0, keepdims=True)
    h = o * jnp.tanh(c)
    return c, h


def ref_forward(parses, embeds, p):
    states_c, states_h = [], []
    for j in range(parses.shape[1]):
        root, children, _ = build_tree(np.asarray(parses[:, j]))
        emb_j = embeds[:, j, :]
        states = {}

        def rec(idx):
            for ch in children[idx]:
                rec(ch)
            if children[idx]:
                cc = jnp.concatenate([states[ch][0] for ch in children[idx]], axis=0)
                hh = jnp.concatenate([states[ch][1] for ch in children[idx]], axis=0)
            else:
                cc = jnp.zeros((1, HIDDEN), jnp.float32)
                hh = jnp.zeros((1, HIDDEN), jnp.float32)
            states[idx] = ref_node_forward(p, emb_j[idx], cc, hh)

        rec(root)
        states_c.append(states[root][0])
        states_h.append(states[root][1])
    return jnp.concatenate(states_c, axis=1), jnp.concatenate(states_h, axis=1)


if __name__ == "__main__":
    key = jax.random.PRNGKey(0)
    pkey, ekey = jax.random.split(key)

    params = init_module_params(pkey, INPUT_SIZE, HIDDEN)
    fused = build_fused_params(params, INPUT_SIZE, HIDDEN)

    # embeds: (seq, batch, input_size), like the PyTorch module's `embeds`
    embeds = jax.random.normal(ekey, (SEQ_LEN, BATCH, INPUT_SIZE), jnp.float32)

    # parses: (seq, batch) of 1-indexed parent positions (0 = root, -1 = skip)
    parses = np.array([
        [3, 0],
        [3, 1],
        [0, 2],
        [3, 3],
        [4, 4],
        [4, 5],
        [6, 6],
        [-1, 7],
    ], dtype=np.int32)

    c_out, h_out = child_sum_tree_lstm_forward(parses, embeds, fused)
    c_out = jax.block_until_ready(c_out)
    h_out = jax.block_until_ready(h_out)

    c_ref, h_ref = ref_forward(parses, embeds, params)

    assert c_out.shape == (1, BATCH * HIDDEN) and h_out.shape == (1, BATCH * HIDDEN)
    assert np.allclose(np.asarray(c_out), np.asarray(c_ref), atol=5e-3, rtol=5e-3)
    assert np.allclose(np.asarray(h_out), np.asarray(h_ref), atol=5e-3, rtol=5e-3)

    print("KERNEL_OK")
</pallas_src>

<mosaic_0001>
module attributes {stable_mosaic.version = 11 : i64} {
  func.func @_tree_lstm_kernel(%arg0: i32, %arg1: memref<16xi32, #tpu.memory_space<smem>>, %arg2: memref<64xi32, #tpu.memory_space<smem>>, %arg3: memref<2xi32, #tpu.memory_space<smem>>, %arg4: memref<1x8x32xf32, #tpu.memory_space<vmem>>, %arg5: memref<96x256xf32, #tpu.memory_space<vmem>>, %arg6: memref<1x256xf32, #tpu.memory_space<vmem>>, %arg7: memref<64x64xf32, #tpu.memory_space<vmem>>, %arg8: memref<1x9x128xf32, #tpu.memory_space<vmem>>, %arg9: memref<4x128xf32, #tpu.memory_space<vmem>>) attributes {dimension_semantics = [#tpu.dimension_semantics<parallel>], iteration_bounds = array<i64: 2>, scalar_prefetch = 3 : i64, scratch_operands = 1 : i64, tpu.core_type = #tpu.core_type<tc>, window_params = [{transform_indices = @transform_0, window_bounds = array<i64: 1, 8, 32>}, {pipeline_mode = #tpu.pipeline_mode<synchronous>, transform_indices = @transform_1, window_bounds = array<i64: 96, 256>}, {pipeline_mode = #tpu.pipeline_mode<synchronous>, transform_indices = @transform_2, window_bounds = array<i64: 1, 256>}, {pipeline_mode = #tpu.pipeline_mode<synchronous>, transform_indices = @transform_3, window_bounds = array<i64: 64, 64>}, {transform_indices = @transform_4, window_bounds = array<i64: 1, 9, 128>}]} {
    %c0 = arith.constant 0 : index
    %c0_0 = arith.constant 0 : index
    %0 = vector.load %arg5[%c0, %c0_0] : memref<96x256xf32, #tpu.memory_space<vmem>>, vector<96x256xf32>
    %c0_1 = arith.constant 0 : index
    %c0_2 = arith.constant 0 : index
    %1 = vector.load %arg6[%c0_1, %c0_2] : memref<1x256xf32, #tpu.memory_space<vmem>>, vector<1x256xf32>
    %c0_3 = arith.constant 0 : index
    %c0_4 = arith.constant 0 : index
    %2 = vector.load %arg7[%c0_3, %c0_4] : memref<64x64xf32, #tpu.memory_space<vmem>>, vector<64x64xf32>
    %cst = arith.constant 0.000000e+00 : f32
    %3 = vector.broadcast %cst : f32 to vector<9x128xf32>
    %c0_5 = arith.constant 0 : index
    %c0_6 = arith.constant 0 : index
    %c0_7 = arith.constant 0 : index
    %4 = vector.load %arg8[%c0_5, %c0_6, %c0_7] : memref<1x9x128xf32, #tpu.memory_space<vmem>>, vector<1x9x128xf32>
    %5 = vector.shape_cast %4 : vector<1x9x128xf32> to vector<9x128xf32>
    %6 = vector.shape_cast %3 : vector<9x128xf32> to vector<1x9x128xf32>
    tpu.vector_store %arg8[%c0_5, %c0_6, %c0_7], %6 {strides = array<i32>} : memref<1x9x128xf32, #tpu.memory_space<vmem>>, vector<1x9x128xf32>,
    %c8_i32 = arith.constant 8 : i32
    %7 = arith.muli %arg0, %c8_i32 : i32
    %8 = arith.index_cast %arg0 : i32 to index
    %9 = memref.load %arg3[%8] : memref<2xi32, #tpu.memory_space<smem>>
    %c0_i32 = arith.constant 0 : i32
    %c0_i32_8 = arith.constant 0 : i32
    %10 = arith.subi %9, %c0_i32_8 : i32
    %11 = arith.addi %c0_i32_8, %10 : i32
    %c1_i32 = arith.constant 1 : i32
    scf.for %arg10 = %c0_i32_8 to %11 step %c1_i32  : i32 {
      %12 = arith.addi %7, %arg10 : i32
      %13 = arith.index_cast %12 : i32 to index
      %14 = memref.load %arg1[%13] : memref<16xi32, #tpu.memory_space<smem>>
      %15 = arith.addi %7, %arg10 : i32
      %c4_i32 = arith.constant 4 : i32
      %16 = arith.muli %15, %c4_i32 : i32
      %c0_i32_9 = arith.constant 0 : i32
      %17 = arith.addi %16, %c0_i32_9 : i32
      %18 = arith.index_cast %17 : i32 to index
      %19 = memref.load %arg2[%18] : memref<64xi32, #tpu.memory_space<smem>>
      %c0_10 = arith.constant 0 : index
      %20 = arith.index_cast %19 : i32 to index
      %c0_11 = arith.constant 0 : index
      %21 = vector.load %arg8[%c0_10, %20, %c0_11] : memref<1x9x128xf32, #tpu.memory_space<vmem>>, vector<1x1x128xf32>
      %22 = vector.shape_cast %21 : vector<1x1x128xf32> to vector<1x128xf32>
      %c0_12 = arith.constant 0 : index
      %c0_13 = arith.constant 0 : index
      %23 = vector.load %arg9[%c0_12, %c0_13] : memref<4x128xf32, #tpu.memory_space<vmem>>, vector<1x128xf32>
      tpu.vector_store %arg9[%c0_12, %c0_13], %22 {strides = array<i32>} : memref<4x128xf32, #tpu.memory_space<vmem>>, vector<1x128xf32>,
      %c1_i32_14 = arith.constant 1 : i32
      %24 = arith.addi %16, %c1_i32_14 : i32
      %25 = arith.index_cast %24 : i32 to index
      %26 = memref.load %arg2[%25] : memref<64xi32, #tpu.memory_space<smem>>
      %c0_15 = arith.constant 0 : index
      %27 = arith.index_cast %26 : i32 to index
      %c0_16 = arith.constant 0 : index
      %28 = vector.load %arg8[%c0_15, %27, %c0_16] : memref<1x9x128xf32, #tpu.memory_space<vmem>>, vector<1x1x128xf32>
      %29 = vector.shape_cast %28 : vector<1x1x128xf32> to vector<1x128xf32>
      %c1 = arith.constant 1 : index
      %c0_17 = arith.constant 0 : index
      %30 = vector.load %arg9[%c1, %c0_17] : memref<4x128xf32, #tpu.memory_space<vmem>>, vector<1x128xf32>
      tpu.vector_store %arg9[%c1, %c0_17], %29 {strides = array<i32>} : memref<4x128xf32, #tpu.memory_space<vmem>>, vector<1x128xf32>,
      %c2_i32 = arith.constant 2 : i32
      %31 = arith.addi %16, %c2_i32 : i32
      %32 = arith.index_cast %31 : i32 to index
      %33 = memref.load %arg2[%32] : memref<64xi32, #tpu.memory_space<smem>>
      %c0_18 = arith.constant 0 : index
      %34 = arith.index_cast %33 : i32 to index
      %c0_19 = arith.constant 0 : index
      %35 = vector.load %arg8[%c0_18, %34, %c0_19] : memref<1x9x128xf32, #tpu.memory_space<vmem>>, vector<1x1x128xf32>
      %36 = vector.shape_cast %35 : vector<1x1x128xf32> to vector<1x128xf32>
      %c2 = arith.constant 2 : index
      %c0_20 = arith.constant 0 : index
      %37 = vector.load %arg9[%c2, %c0_20] : memref<4x128xf32, #tpu.memory_space<vmem>>, vector<1x128xf32>
      tpu.vector_store %arg9[%c2, %c0_20], %36 {strides = array<i32>} : memref<4x128xf32, #tpu.memory_space<vmem>>, vector<1x128xf32>,
      %c3_i32 = arith.constant 3 : i32
      %38 = arith.addi %16, %c3_i32 : i32
      %39 = arith.index_cast %38 : i32 to index
      %40 = memref.load %arg2[%39] : memref<64xi32, #tpu.memory_space<smem>>
      %c0_21 = arith.constant 0 : index
      %41 = arith.index_cast %40 : i32 to index
      %c0_22 = arith.constant 0 : index
      %42 = vector.load %arg8[%c0_21, %41, %c0_22] : memref<1x9x128xf32, #tpu.memory_space<vmem>>, vector<1x1x128xf32>
      %43 = vector.shape_cast %42 : vector<1x1x128xf32> to vector<1x128xf32>
      %c3 = arith.constant 3 : index
      %c0_23 = arith.constant 0 : index
      %44 = vector.load %arg9[%c3, %c0_23] : memref<4x128xf32, #tpu.memory_space<vmem>>, vector<1x128xf32>
      tpu.vector_store %arg9[%c3, %c0_23], %43 {strides = array<i32>} : memref<4x128xf32, #tpu.memory_space<vmem>>, vector<1x128xf32>,
      %c0_24 = arith.constant 0 : index
      %c0_25 = arith.constant 0 : index
      %45 = vector.load %arg9[%c0_24, %c0_25] : memref<4x128xf32, #tpu.memory_space<vmem>>, vector<4x128xf32>
      %46 = vector.extract_strided_slice %45 {offsets = [0, 0], sizes = [4, 64], strides = [1, 1]} : vector<4x128xf32> to vector<4x64xf32>
      %47 = vector.extract_strided_slice %45 {offsets = [0, 64], sizes = [4, 64], strides = [1, 1]} : vector<4x128xf32> to vector<4x64xf32>
      %cst_26 = arith.constant dense<0.000000e+00> : vector<64xf32>
      %48 = vector.multi_reduction <add>, %47, %cst_26 [0] : vector<4x64xf32> to vector<64xf32>
      %49 = vector.shape_cast %48 : vector<64xf32> to vector<1x64xf32>
      %c0_27 = arith.constant 0 : index
      %50 = arith.index_cast %14 : i32 to index
      %c0_28 = arith.constant 0 : index
      %51 = vector.load %arg4[%c0_27, %50, %c0_28] : memref<1x8x32xf32, #tpu.memory_space<vmem>>, vector<1x1x32xf32>
      %52 = vector.shape_cast %51 : vector<1x1x32xf32> to vector<1x32xf32>
      %53 = tpu.concatenate %52, %49 in 1 : vector<1x32xf32>, vector<1x64xf32> -> vector<1x96xf32>
      %cst_29 = arith.constant dense<0.000000e+00> : vector<1x256xf32>
      %54 = tpu.matmul %53, %0, %cst_29 {dimension_numbers = #tpu.dot_dimension_numbers<[1], [0], [0], [1], [0, 0, 1, 1], [], []>} : vector<1x96xf32>, vector<96x256xf32>, vector<1x256xf32> -> vector<1x256xf32>
      %55 = arith.addf %54, %1 : vector<1x256xf32>
      %56 = vector.extract_strided_slice %55 {offsets = [0, 0], sizes = [1, 64], strides = [1, 1]} : vector<1x256xf32> to vector<1x64xf32>
      %57 = arith.negf %56 : vector<1x64xf32>
      %58 = math.exp %57 : vector<1x64xf32>
      %cst_30 = arith.constant 1.000000e+00 : f32
      %59 = vector.broadcast %cst_30 : f32 to vector<1x64xf32>
      %60 = arith.addf %59, %58 : vector<1x64xf32>
      %61 = arith.divf %59, %60 : vector<1x64xf32>
      %62 = vector.extract_strided_slice %55 {offsets = [0, 64], sizes = [1, 64], strides = [1, 1]} : vector<1x256xf32> to vector<1x64xf32>
      %63 = arith.negf %62 : vector<1x64xf32>
      %64 = math.exp %63 : vector<1x64xf32>
      %cst_31 = arith.constant 1.000000e+00 : f32
      %65 = vector.broadcast %cst_31 : f32 to vector<1x64xf32>
      %66 = arith.addf %65, %64 : vector<1x64xf32>
      %67 = arith.divf %65, %66 : vector<1x64xf32>
      %68 = vector.extract_strided_slice %55 {offsets = [0, 128], sizes = [1, 64], strides = [1, 1]} : vector<1x256xf32> to vector<1x64xf32>
      %69 = math.tanh %68 : vector<1x64xf32>
      %70 = vector.extract_strided_slice %55 {offsets = [0, 192], sizes = [1, 64], strides = [1, 1]} : vector<1x256xf32> to vector<1x64xf32>
      %cst_32 = arith.constant dense<0.000000e+00> : vector<4x64xf32>
      %71 = tpu.matmul %47, %2, %cst_32 {dimension_numbers = #tpu.dot_dimension_numbers<[1], [0], [0], [1], [0, 0, 1, 1], [], []>} : vector<4x64xf32>, vector<64x64xf32>, vector<4x64xf32> -> vector<4x64xf32>
      %72 = vector.broadcast %70 : vector<1x64xf32> to vector<4x64xf32>
      %73 = arith.addf %71, %72 : vector<4x64xf32>
      %74 = arith.negf %73 : vector<4x64xf32>
      %75 = math.exp %74 : vector<4x64xf32>
      %cst_33 = arith.constant 1.000000e+00 : f32
      %76 = vector.broadcast %cst_33 : f32 to vector<4x64xf32>
      %77 = arith.addf %76, %75 : vector<4x64xf32>
      %78 = arith.divf %76, %77 : vector<4x64xf32>
      %79 = arith.mulf %78, %46 : vector<4x64xf32>
      %80 = arith.mulf %61, %69 : vector<1x64xf32>
      %cst_34 = arith.constant dense<0.000000e+00> : vector<64xf32>
      %81 = vector.multi_reduction <add>, %79, %cst_34 [0] : vector<4x64xf32> to vector<64xf32>
      %82 = vector.shape_cast %81 : vector<64xf32> to vector<1x64xf32>
      %83 = arith.addf %80, %82 : vector<1x64xf32>
      %84 = math.tanh %83 : vector<1x64xf32>
      %85 = arith.mulf %67, %84 : vector<1x64xf32>
      %86 = tpu.concatenate %83, %85 in 1 : vector<1x64xf32>, vector<1x64xf32> -> vector<1x128xf32>
      %c0_35 = arith.constant 0 : index
      %87 = arith.index_cast %14 : i32 to index
      %c0_36 = arith.constant 0 : index
      %88 = vector.load %arg8[%c0_35, %87, %c0_36] : memref<1x9x128xf32, #tpu.memory_space<vmem>>, vector<1x1x128xf32>
      %89 = vector.shape_cast %88 : vector<1x1x128xf32> to vector<1x128xf32>
      %90 = vector.shape_cast %86 : vector<1x128xf32> to vector<1x1x128xf32>
      tpu.vector_store %arg8[%c0_35, %87, %c0_36], %90 {strides = array<i32>} : memref<1x9x128xf32, #tpu.memory_space<vmem>>, vector<1x1x128xf32>,
    }
    return
  }
  func.func @transform_0(%arg0: i32, %arg1: memref<16xi32, #tpu.memory_space<smem>>, %arg2: memref<64xi32, #tpu.memory_space<smem>>, %arg3: memref<2xi32, #tpu.memory_space<smem>>) -> (i32, i32, i32) {
    %c0_i32 = arith.constant 0 : i32
    %c0_i32_0 = arith.constant 0 : i32
    %c0_i32_1 = arith.constant 0 : i32
    return %arg0, %c0_i32, %c0_i32_0 : i32, i32, i32
  }
  func.func @transform_1(%arg0: i32, %arg1: memref<16xi32, #tpu.memory_space<smem>>, %arg2: memref<64xi32, #tpu.memory_space<smem>>, %arg3: memref<2xi32, #tpu.memory_space<smem>>) -> (i32, i32) {
    %c0_i32 = arith.constant 0 : i32
    %c0_i32_0 = arith.constant 0 : i32
    %c0_i32_1 = arith.constant 0 : i32
    return %c0_i32, %c0_i32_0 : i32, i32
  }
  func.func @transform_2(%arg0: i32, %arg1: memref<16xi32, #tpu.memory_space<smem>>, %arg2: memref<64xi32, #tpu.memory_space<smem>>, %arg3: memref<2xi32, #tpu.memory_space<smem>>) -> (i32, i32) {
    %c0_i32 = arith.constant 0 : i32
    %c0_i32_0 = arith.constant 0 : i32
    %c0_i32_1 = arith.constant 0 : i32
    return %c0_i32, %c0_i32_0 : i32, i32
  }
  func.func @transform_3(%arg0: i32, %arg1: memref<16xi32, #tpu.memory_space<smem>>, %arg2: memref<64xi32, #tpu.memory_space<smem>>, %arg3: memref<2xi32, #tpu.memory_space<smem>>) -> (i32, i32) {
    %c0_i32 = arith.constant 0 : i32
    %c0_i32_0 = arith.constant 0 : i32
    %c0_i32_1 = arith.constant 0 : i32
    return %c0_i32, %c0_i32_0 : i32, i32
  }
  func.func @transform_4(%arg0: i32, %arg1: memref<16xi32, #tpu.memory_space<smem>>, %arg2: memref<64xi32, #tpu.memory_space<smem>>, %arg3: memref<2xi32, #tpu.memory_space<smem>>) -> (i32, i32, i32) {
    %c0_i32 = arith.constant 0 : i32
    %c0_i32_0 = arith.constant 0 : i32
    %c0_i32_1 = arith.constant 0 : i32
    return %arg0, %c0_i32, %c0_i32_0 : i32, i32, i32
  }
}

</mosaic_0001>

<llo_original>
// kernel: tpu_custom_call.1
$region0: #{tpu_custom_call.1}
  #allocation0 [shape = 'u32[]', space=smem, size = 0x4, offset = 0x4, fixed_abs, tag = 'smem constant byte address 0x4 - core index']
  #allocation1 [shape = 'u32[144,128]{1,0:T(1,128)}', space=vmem, size = 0x12000, scoped, tag = 'internal scratch']
  #allocation2 [shape = 'f32[4,128]{1,0:T(4,128)}', space=vmem, size = 0x800, scoped, tag = 'scratch operand']
  #allocation3 [shape = 's32[1]{0}', space=sflag, size = 0x4, scoped, tag = 'scoped memory for tpu_custom_call.1']
  #allocation4 [shape = 'u8[512]{0}', space=smem, size = 0x200, scoped, tag = 'prefetched SMEM operand 0']
  #allocation5 [shape = 'u8[512]{0}', space=smem, size = 0x200, scoped, tag = 'prefetched SMEM operand 1']
  #allocation6 [shape = 'u8[512]{0}', space=smem, size = 0x200, scoped, tag = 'prefetched SMEM operand 2']
  %s0 = inlined_call_operand.hbm [shape: s32[16], index: 0, kind: input, shape index: {}]
  %s1 = inlined_call_operand.vmem [shape: s32[64], index: 1, kind: input, shape index: {}]
  %s2 = inlined_call_operand.vmem [shape: s32[2], index: 2, kind: input, shape index: {}]
  %s3 = inlined_call_operand.hbm [shape: f32[2,8,32], index: 3, kind: input, shape index: {}]
  %s4 = inlined_call_operand.hbm [shape: f32[96,256], index: 4, kind: input, shape index: {}]
  %s5 = inlined_call_operand.vmem [shape: f32[1,256], index: 5, kind: input, shape index: {}]
  %s6 = inlined_call_operand.hbm [shape: f32[64,64], index: 6, kind: input, shape index: {}]
  %s7 = inlined_call_operand.vmem [shape: f32[2,9,128], index: 7, kind: output, shape index: {}]
  %s8 = sld [smem:[#allocation0]]
  $region68: #{tpu_custom_call.1} parent=0
    _
  %s10 = ssub.s32 1, %s8
  %s11 = scalar_select 0, %s10, %s8
  %13 = dma.hbm_to_smem %s0, 16, [#allocation4], [#allocation3]
  %s14 = sshll.u32 %s1, 4
  %s15 = int_to_ptr.vmem [resolvable:$true] %s14
  %17 = dma.vmem_to_smem %s15, 16, [#allocation5], [#allocation3]
  %s18 = sshll.u32 %s2, 4
  %s19 = int_to_ptr.vmem [resolvable:$true] %s18
  %21 = dma.vmem_to_smem %s19, 16, [#allocation6], [#allocation3]
  %22 = dma.done [#allocation3], 48
  %23 = sfence
  $region1: #{tpu_custom_call.1} parent=0
    #allocation7 [shape = 'u8[8192]{0}', space=vmem, size = 0x2000, scoped, tag = 'input window, operand 3']
    #allocation8 [shape = 's32[2]{0}', space=sflag, size = 0x8, scoped, tag = 'scoped memory for tpu_custom_call.1']
    #allocation9 [shape = 'u8[98304]{0}', space=vmem, size = 0x18000, scoped, tag = 'input window, operand 4, single buffered']
    #allocation10 [shape = 's32[1]{0}', space=sflag, size = 0x4, scoped, tag = 'scoped memory for tpu_custom_call.1']
    #allocation11 [shape = 'u8[32768]{0}', space=vmem, size = 0x8000, scoped, tag = 'input window, operand 6, single buffered']
    %24 = vsyncpa [#allocation8], 0
    %s25 = scalar_lea.sflag [#allocation8], 1
    %26 = vsyncpa %s25, 0
    %27 = vsyncpa [#allocation10], 0
    loop: start=0, step=1, limit=4
    $region2: #{tpu_custom_call.1} parent=1 // loop_pre_header
      _
    $region3: #{tpu_custom_call.1} parent=1 // loop_header
      %s29 = sphi 0, %s33
      %p30 = scmp.ge.s32.totalorder %s29, 4
      %s39 = sphi 0, %s41
      %s42 = sphi 0, %s39
      %s43 = sphi 0, %s42
      %s59 = sphi 0, %s43
      %s63 = sphi 0, %s63
      %s65 = sphi 0, %s63
      %s66 = sphi 0, %s65
      %s80 = sphi 0, %s66
      %s84 = sphi 0, %s84
      %s86 = sphi 0, %s84
      %s87 = sphi 0, %s86
      %s101 = sphi 0, %s87
      %s105 = sphi 0, %s105
      %s107 = sphi 0, %s105
      %s108 = sphi 0, %s107
      %s122 = sphi 0, %s108
      %s128 = sphi 0, %s130
      %s131 = sphi 0, %s128
      %s132 = sphi 0, %s131
      %s148 = sphi 0, %s132
    $region4: #{tpu_custom_call.1} parent=1 // loop_header_branch
      %32 = sbr.rel (%p30) target = $region8
    $region5: #{tpu_custom_call.1} parent=1 // loop_body
      %s34 = ssub.s32 %s29, 1
      %s35 = ssub.s32 %s29, 2
      %s36 = sadd.s32 %s29, 1
      %s37 = ssub.s32 %s29, %s36
      %p38 = scmp.eq.s32.totalorder %s37, 0
      %s40 = sadd.s32 %s39, 1
      %s41 = scalar_select %p38, %s39, %s40
      %p44 = pneg %p38
      %p45 = scmp.eq.s32.totalorder %s29, 1
      %p46 = por %p44, %p45
      %p47 = scmp.ne.s32.totalorder %s39, %s42
      %p48 = scmp.eq.s32.totalorder %s29, 0
      %p49 = por %p47, %p48
      %p50 = scmp.ne.s32.totalorder %s39, %s42
      %p51 = scmp.eq.s32.totalorder %s34, 1
      %p52 = por %p50, %p51
      %p53 = scmp.ne.s32.totalorder %s42, %s43
      %p54 = scmp.eq.s32.totalorder %s34, 0
      %p55 = por %p53, %p54
      %p56 = scmp.ne.s32.totalorder %s42, %s43
      %p57 = scmp.eq.s32.totalorder %s35, 1
      %p58 = por %p56, %p57
      %p60 = scmp.ne.s32.totalorder %s43, %s59
      %p61 = scmp.eq.s32.totalorder %s35, 0
      %p62 = por %p60, %p61
      %s64 = sadd.s32 %s63, 1
      %p67 = scmp.eq.s32.totalorder %s29, 1
      %p68 = scmp.ne.s32.totalorder %s63, %s65
      %p69 = scmp.eq.s32.totalorder %s29, 0
      %p70 = por %p68, %p69
      %p71 = scmp.ne.s32.totalorder %s63, %s65
      %p72 = scmp.eq.s32.totalorder %s34, 1
      %p73 = por %p71, %p72
      %p74 = scmp.ne.s32.totalorder %s65, %s66
      %p75 = scmp.eq.s32.totalorder %s34, 0
      %p76 = por %p74, %p75
      %p77 = scmp.ne.s32.totalorder %s65, %s66
      %p78 = scmp.eq.s32.totalorder %s35, 1
      %p79 = por %p77, %p78
      %p81 = scmp.ne.s32.totalorder %s66, %s80
      %p82 = scmp.eq.s32.totalorder %s35, 0
      %p83 = por %p81, %p82
      %s85 = sadd.s32 %s84, 1
      %p88 = scmp.eq.s32.totalorder %s29, 1
      %p89 = scmp.ne.s32.totalorder %s84, %s86
      %p90 = scmp.eq.s32.totalorder %s29, 0
      %p91 = por %p89, %p90
      %p92 = scmp.ne.s32.totalorder %s84, %s86
      %p93 = scmp.eq.s32.totalorder %s34, 1
      %p94 = por %p92, %p93
      %p95 = scmp.ne.s32.totalorder %s86, %s87
      %p96 = scmp.eq.s32.totalorder %s34, 0
      %p97 = por %p95, %p96
      %p98 = scmp.ne.s32.totalorder %s86, %s87
      %p99 = scmp.eq.s32.totalorder %s35, 1
      %p100 = por %p98, %p99
      %p102 = scmp.ne.s32.totalorder %s87, %s101
      %p103 = scmp.eq.s32.totalorder %s35, 0
      %p104 = por %p102, %p103
      %s106 = sadd.s32 %s105, 1
      %p109 = scmp.eq.s32.totalorder %s29, 1
      %p110 = scmp.ne.s32.totalorder %s105, %s107
      %p111 = scmp.eq.s32.totalorder %s29, 0
      %p112 = por %p110, %p111
      %p113 = scmp.ne.s32.totalorder %s105, %s107
      %p114 = scmp.eq.s32.totalorder %s34, 1
      %p115 = por %p113, %p114
      %p116 = scmp.ne.s32.totalorder %s107, %s108
      %p117 = scmp.eq.s32.totalorder %s34, 0
      %p118 = por %p116, %p117
      %p119 = scmp.ne.s32.totalorder %s107, %s108
      %p120 = scmp.eq.s32.totalorder %s35, 1
      %p121 = por %p119, %p120
      %p123 = scmp.ne.s32.totalorder %s108, %s122
      %p124 = scmp.eq.s32.totalorder %s35, 0
      %p125 = por %p123, %p124
      %s126 = ssub.s32 %s29, %s36
      %p127 = scmp.eq.s32.totalorder %s126, 0
      %s129 = sadd.s32 %s128, 1
      %s130 = scalar_select %p127, %s128, %s129
      %p133 = pneg %p127
      %p134 = scmp.eq.s32.totalorder %s29, 1
      %p135 = por %p133, %p134
      %p136 = scmp.ne.s32.totalorder %s128, %s131
      %p137 = scmp.eq.s32.totalorder %s29, 0
      %p138 = por %p136, %p137
      %p139 = scmp.ne.s32.totalorder %s128, %s131
      %p140 = scmp.eq.s32.totalorder %s34, 1
      %p141 = por %p139, %p140
      %p142 = scmp.ne.s32.totalorder %s131, %s132
      %p143 = scmp.eq.s32.totalorder %s34, 0
      %p144 = por %p142, %p143
      %p145 = scmp.ne.s32.totalorder %s131, %s132
      %p146 = scmp.eq.s32.totalorder %s35, 1
      %p147 = por %p145, %p146
      %p149 = scmp.ne.s32.totalorder %s132, %s148
      %p150 = scmp.eq.s32.totalorder %s35, 0
      %p151 = por %p149, %p150
      %p152 = scmp.le.s32.totalorder 1, %s29
      %p153 = scmp.lt.s32.totalorder %s29, 3
      %p154 = pnand %p152, %p153
      %p155 = pneg %p154
      // Predicated region
      $region9: #{tpu_custom_call.1} parent=5 // pred_check
        _
      $region10: #{tpu_custom_call.1} parent=5 // pred_check_branch
        %157 = sbr.rel (%p154) target = $region12
      $region11: #{tpu_custom_call.1} parent=5 // pred_region
        %s158 = ssub.s32 %s29, 1
        // Predicated region
        $region13: #{tpu_custom_call.1} parent=11 // pred_check
          %p159 = pneg %p76
        $region14: #{tpu_custom_call.1} parent=11 // pred_check_branch
          %161 = sbr.rel (%p159) target = $region16
        $region15: #{tpu_custom_call.1} parent=11 // pred_region
          %s163 = ssub.s32 3072, 3072
          %164 = vsyncadd [#allocation10], %s163
          %s165 = sshll.u32 [#allocation9], 4
          %s166 = int_to_ptr.vmem [resolvable:$true] %s165
          %171 = dma.hbm_to_vmem [thread:$0]  %s4, 3072, %s166, [#allocation10], 256, 256, 16
        $region16: #{tpu_custom_call.1} parent=11 // pred_fallthru
          _
        // Predicated region
        $region17: #{tpu_custom_call.1} parent=11 // pred_check
          %p172 = pneg %p97
        $region18: #{tpu_custom_call.1} parent=11 // pred_check_branch
          %174 = sbr.rel (%p172) target = $region20
        $region19: #{tpu_custom_call.1} parent=11 // pred_region
          _
        $region20: #{tpu_custom_call.1} parent=11 // pred_fallthru
          _
        // Predicated region
        $region21: #{tpu_custom_call.1} parent=11 // pred_check
          %p175 = pneg %p118
        $region22: #{tpu_custom_call.1} parent=11 // pred_check_branch
          %177 = sbr.rel (%p175) target = $region24
        $region23: #{tpu_custom_call.1} parent=11 // pred_region
          %s179 = ssub.s32 1024, 1024
          %180 = vsyncadd [#allocation10], %s179
          %s181 = sshll.u32 [#allocation11], 4
          %s182 = int_to_ptr.vmem [resolvable:$true] %s181
          %187 = dma.hbm_to_vmem [thread:$0]  %s6, 1024, %s182, [#allocation10], 128, 128, 8
        $region24: #{tpu_custom_call.1} parent=11 // pred_fallthru
          _
      $region12: #{tpu_custom_call.1} parent=5 // pred_fallthru
        _
      %p188 = scmp.lt.s32.totalorder %s29, 2
      // Predicated region
      $region25: #{tpu_custom_call.1} parent=5 // pred_check
        %p189 = pneg %p188
      $region26: #{tpu_custom_call.1} parent=5 // pred_check_branch
        %191 = sbr.rel (%p189) target = $region28
      $region27: #{tpu_custom_call.1} parent=5 // pred_region
        // Predicated region
        $region29: #{tpu_custom_call.1} parent=27 // pred_check
          %p192 = pneg %p49
        $region30: #{tpu_custom_call.1} parent=27 // pred_check_branch
          %194 = sbr.rel (%p192) target = $region32
        $region31: #{tpu_custom_call.1} parent=27 // pred_region
          %s195 = sand.u32 %s39, 1
          %s196 = scalar_lea.sflag [#allocation8], %s195
          %s197 = sand.u32 %s39, 1
          %s198 = smul.addr %s197, 8
          %s199 = scalar_lea.vmem [#allocation7], %s198
          %s201 = ssub.s32 128, 128
          %202 = vsyncadd %s196, %s201
          %s203 = smul.addr %s29, 128
          %s204 = scalar_lea.hbm %s3, %s203
          %s206 = sshll.u32 %s199, 4
          %s207 = int_to_ptr.vmem [resolvable:$true] %s206
          %209 = dma.hbm_to_vmem [thread:$0]  %s204, 128, %s207, %s196
        $region32: #{tpu_custom_call.1} parent=27 // pred_fallthru
          _
      $region28: #{tpu_custom_call.1} parent=5 // pred_fallthru
        _
      %p210 = scmp.le.s32.totalorder 1, %s29
      %p211 = scmp.lt.s32.totalorder %s29, 3
      %p212 = pnand %p210, %p211
      %p213 = pneg %p212
      // Predicated region
      $region33: #{tpu_custom_call.1} parent=5 // pred_check
        _
      $region34: #{tpu_custom_call.1} parent=5 // pred_check_branch
        %215 = sbr.rel (%p212) target = $region36
      $region35: #{tpu_custom_call.1} parent=5 // pred_region
        %s216 = ssub.s32 %s29, 1
        %s217 = sand.u32 %s42, 1
        %s218 = scalar_lea.sflag [#allocation8], %s217
        %s219 = sand.u32 %s42, 1
        %s220 = smul.addr %s219, 8
        %s221 = scalar_lea.vmem [#allocation7], %s220
        // Predicated region
        $region37: #{tpu_custom_call.1} parent=35 // pred_check
          %p222 = pneg %p55
        $region38: #{tpu_custom_call.1} parent=35 // pred_check_branch
          %224 = sbr.rel (%p222) target = $region40
        $region39: #{tpu_custom_call.1} parent=35 // pred_region
          %225 = dma.done %s218, 128
        $region40: #{tpu_custom_call.1} parent=35 // pred_fallthru
          _
        // Predicated region
        $region41: #{tpu_custom_call.1} parent=35 // pred_check
          %p226 = pneg %p76
        $region42: #{tpu_custom_call.1} parent=35 // pred_check_branch
          %228 = sbr.rel (%p226) target = $region44
        $region43: #{tpu_custom_call.1} parent=35 // pred_region
          %229 = dma.done [#allocation10], 3072
        $region44: #{tpu_custom_call.1} parent=35 // pred_fallthru
          _
        // Predicated region
        $region45: #{tpu_custom_call.1} parent=35 // pred_check
          %p230 = pneg %p118
        $region46: #{tpu_custom_call.1} parent=35 // pred_check_branch
          %232 = sbr.rel (%p230) target = $region48
        $region47: #{tpu_custom_call.1} parent=35 // pred_region
          %233 = dma.done [#allocation10], 1024
        $region48: #{tpu_custom_call.1} parent=35 // pred_fallthru
          _
        %s234 = sand.u32 %s42, 1
        %s235 = scalar_lea.sflag [#allocation8], %s234
        %s236 = sand.u32 %s42, 1
        %s237 = smul.addr %s236, 8
        %s238 = scalar_lea.vmem [#allocation7], %s237
        %p239 = pneg %p55
        %p240 = pneg %p52
        %p241 = pneg %p76
        %p242 = pneg %p73
        %p243 = pneg %p97
        %p244 = pneg %p94
        %p245 = pneg %p118
        %p246 = pneg %p115
        %p247 = pneg %p144
        %p248 = pneg %p141
        %p249 = scmp.lt.s32.totalorder %s34, 1
        %s250 = scalar_select %p249, %s34, 1
        %s251 = smul.addr %s250, 2
        %s252 = smul.addr %s251, 8
        %s253 = scalar_lea.vmem %s7, %s252
        %p254 = scmp.lt.s32.totalorder %s34, 1
        %s255 = scalar_select %p254, %s34, 1
        %s256 = smul.addr %s255, 2
        %s257 = smul.addr %s256, 8
        %s258 = scalar_lea.vmem %s7, %s257
        %v259 = vld [vmem:[#allocation9] sm:$0xff]
        %v260 = vld [vmem:[#allocation9 + $0x8] sm:$0xff]
        %v261 = vld [vmem:[#allocation9 + $0x10] sm:$0xff]
        %v262 = vld [vmem:[#allocation9 + $0x18] sm:$0xff]
        %v263 = vld [vmem:[#allocation9 + $0x20] sm:$0xff]
        %v264 = vld [vmem:[#allocation9 + $0x28] sm:$0xff]
        %v265 = vld [vmem:[#allocation9 + $0x30] sm:$0xff]
        %v266 = vld [vmem:[#allocation9 + $0x38] sm:$0xff]
        %v267 = vld [vmem:[#allocation9 + $0x40] sm:$0xff]
        %v268 = vld [vmem:[#allocation9 + $0x48] sm:$0xff]
        %v269 = vld [vmem:[#allocation9 + $0x50] sm:$0xff]
        %v270 = vld [vmem:[#allocation9 + $0x58] sm:$0xff]
        %v271 = vld [vmem:[#allocation9 + $0x60] sm:$0xff]
        %v272 = vld [vmem:[#allocation9 + $0x68] sm:$0xff]
        %v273 = vld [vmem:[#allocation9 + $0x70] sm:$0xff]
        %v274 = vld [vmem:[#allocation9 + $0x78] sm:$0xff]
        %v275 = vld [vmem:[#allocation9 + $0x80] sm:$0xff]
        %v276 = vld [vmem:[#allocation9 + $0x88] sm:$0xff]
        %v277 = vld [vmem:[#allocation9 + $0x90] sm:$0xff]
        %v278 = vld [vmem:[#allocation9 + $0x98] sm:$0xff]
        %v279 = vld [vmem:[#allocation9 + $0xa0] sm:$0xff]
        %v280 = vld [vmem:[#allocation9 + $0xa8] sm:$0xff]
        %v281 = vld [vmem:[#allocation9 + $0xb0] sm:$0xff]
        %v282 = vld [vmem:[#allocation9 + $0xb8] sm:$0xff]
        %v283 = vld [vmem:[%s5] sm:$0x3]
        %v284 = vld [vmem:[#allocation11] sm:$0xff]
        %v285 = vld [vmem:[#allocation11 + $0x8] sm:$0xff]
        %v286 = vld [vmem:[#allocation11 + $0x10] sm:$0xff]
        %v287 = vld [vmem:[#allocation11 + $0x18] sm:$0xff]
        %v288 = vld [vmem:[#allocation11 + $0x20] sm:$0xff]
        %v289 = vld [vmem:[#allocation11 + $0x28] sm:$0xff]
        %v290 = vld [vmem:[#allocation11 + $0x30] sm:$0xff]
        %v291 = vld [vmem:[#allocation11 + $0x38] sm:$0xff]
        %292 = vst [vmem:[%s258] sm:$0xff] 0.0
        %293 = vst [vmem:[%s258 + $0x8] sm:$0x1] 0.0
        %s294 = smul.u32 %s34, 8
        %s295 = sld [smem:[#allocation6 + %s34]]
        // While loop
        $region49: #{tpu_custom_call.1} parent=35 // loop_pre_header
          _
        $region50: #{tpu_custom_call.1} parent=35 // loop_header
          %s297 = sphi 0, %s299
          %p298 = scmp.ge.s32.totalorder %s297, %s295
        $region51: #{tpu_custom_call.1} parent=35 // loop_header_branch
          %301 = sbr.rel (%p298) target = $region55
        $region52: #{tpu_custom_call.1} parent=35 // loop_body
          %s302 = sadd.s32 %s294, %s297
          %s303 = sld [smem:[#allocation4 + %s302]]
          %s304 = smul.u32 %s302, 4
          %s305 = sld [smem:[#allocation5 + %s304]]
          %s306 = scalar_lea.vmem %s258, %s305
          %v307 = vld [vmem:[%s306] sm:$0x1]
          %308 = vst [vmem:[#allocation2] sm:$0x1] %v307
          %s309 = sadd.s32 %s304, 1
          %s310 = sld [smem:[#allocation5 + %s309]]
          %s311 = scalar_lea.vmem %s258, %s310
          %v312 = vld [vmem:[%s311] sm:$0x1]
          %313 = vst [vmem:[#allocation2 + $0x1] sm:$0x1] %v312
          %s314 = sadd.s32 %s304, 2
          %s315 = sld [smem:[#allocation5 + %s314]]
          %s316 = scalar_lea.vmem %s258, %s315
          %v317 = vld [vmem:[%s316] sm:$0x1]
          %318 = vst [vmem:[#allocation2 + $0x2] sm:$0x1] %v317
          %s319 = sadd.s32 %s304, 3
          %s320 = sld [smem:[#allocation5 + %s319]]
          %s321 = scalar_lea.vmem %s258, %s320
          %v322 = vld [vmem:[%s321] sm:$0x1]
          %323 = vst [vmem:[#allocation2 + $0x3] sm:$0x1] %v322
          %v324 = vld [vmem:[#allocation2] sm:$0xf]
          %vm325 = vcmask 1043968
          %v326 = vsel %vm325, %v324, 0.0
          %v327 = vrot.slane %v326, 4
          %v328 = vadd.f32 %v326, %v327
          %v329 = vrot.slane %v328, 2
          %v330 = vadd.f32 %v328, %v329
          %v331 = vrot.slane %v330, 1
          %v332 = vadd.f32 %v330, %v331
          %s333 = scalar_lea.vmem %s221, %s303 [#allocation7]
          %v334 = vld [vmem:[%s333] sm:$0x1]
          %336 = vrot.lane.b32.xlu0 %v332, 96
          %v337 = vpop.permute.xlu0 %336
          %vm339 = vcmask 261120
          %v340 = vsel %vm339, %v334, %v337
          %v342 = vlaneseq
          %v343 = vshrl.u32 %v342, 7
          %v344 = vsub.s32 0, %v343
          %v345 = vrot.slane %v283, %v344
          %v346 = vlaneseq
          %v347 = vshrl.u32 %v346, 7
          %v348 = vsub.s32 1, %v347
          %v349 = vrot.slane %v283, %v348
          %vm352 = vcmask 785408
          %v354 = vsel %vm352, %v340, 0
          %356 = vmatprep.subr.mxu0 %v260
          %357 = vmatpush1.msra.mxu0 %v259
          %358 = vmatprep.subr.mxu0 %v262
          %359 = vmatpush1.msra.mxu0 %v261
          %360 = vmatprep.subr.mxu0 %v264
          %361 = vmatpush1.msra.mxu0 %v263
          %362 = vmatprep.subr.mxu0 %v266
          %363 = vmatpush1.msra.mxu0 %v265
          %364 = vmatprep.subr.mxu0 %v268
          %365 = vmatpush1.msra.mxu0 %v267
          %366 = vmatprep.subr.mxu0 %v270
          %367 = vmatpush1.msra.mxu0 %v269
          %368 = vmatprep.subr.mxu0 %v272
          %369 = vmatpush1.msra.mxu0 %v271
          %370 = vmatprep.subr.mxu0 %v274
          %371 = vmatpush1.msra.mxu0 %v273
          %372 = vmatprep.subr.mxu0 %v276
          %373 = vmatpush1.msra.mxu0 %v275
          %374 = vmatprep.subr.mxu0 %v278
          %375 = vmatpush1.msra.mxu0 %v277
          %376 = vmatprep.subr.mxu0 %v280
          %377 = vmatpush1.msra.mxu0 %v279
          %378 = vmatprep.subr.mxu0 %v282
          %379 = vmatpush1.msra.mxu0 %v281
          %380 = vmatprep.subr.mxu0 0.0
          %381 = vmatpush1.msra.mxu0 0.0
          %382 = vmatprep.subr.mxu0 0.0
          %383 = vmatpush1.msra.mxu0 0.0
          %384 = vmatprep.subr.mxu0 0.0
          %385 = vmatpush1.msra.mxu0 0.0
          %386 = vmatprep.subr.mxu0 0.0
          %387 = vmatpush1.msra.mxu0 0.0
          %388 = vmatprep.subr.mxu0 0.0
          %389 = vmatpush1.msra.mxu0 0.0
          %390 = vmatprep.subr.mxu0 0.0
          %391 = vmatpush1.msra.mxu0 0.0
          %392 = vmatprep.subr.mxu0 0.0
          %393 = vmatpush1.msra.mxu0 0.0
          %394 = vmatprep.subr.mxu0 0.0
          %395 = vmatpush1.msra.mxu0 0.0
          %396 = vmatprep.subr.mxu0 0.0
          %397 = vmatpush1.msra.mxu0 0.0
          %398 = vmatprep.subr.mxu0 0.0
          %399 = vmatpush1.msra.mxu0 0.0
          %400 = vmatprep.subr.mxu0 0.0
          %401 = vmatpush1.msra.mxu0 0.0
          %402 = vmatprep.subr.mxu0 0.0
          %403 = vmatpush1.msra.mxu0 0.0
          %404 = vmatprep.subr.mxu0 0.0
          %405 = vmatpush1.msra.mxu0 0.0
          %406 = vmatprep.subr.mxu0 0.0
          %407 = vmatpush1.msra.mxu0 0.0
          %408 = vmatprep.subr.mxu0 0.0
          %409 = vmatpush1.msra.mxu0 0.0
          %410 = vmatprep.subr.mxu0 0.0
          %411 = vmatpush1.msra.mxu0 0.0
          %412 = vmatprep.subr.mxu0 0.0
          %413 = vmatpush1.msra.mxu0 0.0
          %414 = vmatprep.subr.mxu0 0.0
          %415 = vmatpush1.msra.mxu0 0.0
          %416 = vmatprep.subr.mxu0 0.0
          %417 = vmatpush1.msra.mxu0 0.0
          %418 = vmatprep.subr.mxu0 0.0
          %419 = vmatpush1.msra.mxu0 0.0
          %420 = vmatprep.mubr.f32.mxu0 0.0
          %421 = vmatmul.mubr.f32.gmra.mrb[0].mxu0 %v354
          %v422 = vpop.f32.mrb[0].mxu0
          %v423 = vadd.f32 %v345, %v422
          %v424 = vpop.f32.mrb[0].mxu0
          %v425 = vadd.f32 %v349, %v424
          %426 = vdwg.mxu0
          %v427 = vxor.u32 %v423, 2147483648
          %v428 = vmul.f32 %v427, 1.442695
          %v429 = vpow.pop %v428
          %v430 = vadd.f32 %v429, 1.0
          %v431 = vrcp.pop %v430
          %v432 = vmul.f32 1.0, %v431
          %v433 = vtanh.pop %v425
          %v434 = vlaneseq
          %v435 = vshrl.u32 %v434, 7
          %v436 = vsub.s32 0, %v435
          %v437 = vrot.slane %v425, %v436
          %439 = vrot.lane.b32.xlu0 %v324, 64
          %v440 = vpop.permute.xlu0 %439
          %442 = vrot.lane.b32.xlu0 %v437, 64
          %v443 = vpop.permute.xlu0 %442
          %vm445 = vcmask 523264
          %v446 = vsel %vm445, %v440, 0
          %448 = vmatprep.subr.mxu0 0.0
          %449 = vmatpush1.msra.mxu0 %v284
          %450 = vmatprep.subr.mxu0 0.0
          %451 = vmatpush1.msra.mxu0 %v285
          %452 = vmatprep.subr.mxu0 0.0
          %453 = vmatpush1.msra.mxu0 %v286
          %454 = vmatprep.subr.mxu0 0.0
          %455 = vmatpush1.msra.mxu0 %v287
          %456 = vmatprep.subr.mxu0 0.0
          %457 = vmatpush1.msra.mxu0 %v288
          %458 = vmatprep.subr.mxu0 0.0
          %459 = vmatpush1.msra.mxu0 %v289
          %460 = vmatprep.subr.mxu0 0.0
          %461 = vmatpush1.msra.mxu0 %v290
          %462 = vmatprep.subr.mxu0 0.0
          %463 = vmatpush1.msra.mxu0 %v291
          %464 = vmatprep.subr.mxu0 0.0
          %465 = vmatpush1.msra.mxu0 0.0
          %466 = vmatprep.subr.mxu0 0.0
          %467 = vmatpush1.msra.mxu0 0.0
          %468 = vmatprep.subr.mxu0 0.0
          %469 = vmatpush1.msra.mxu0 0.0
          %470 = vmatprep.subr.mxu0 0.0
          %471 = vmatpush1.msra.mxu0 0.0
          %472 = vmatprep.subr.mxu0 0.0
          %473 = vmatpush1.msra.mxu0 0.0
          %474 = vmatprep.subr.mxu0 0.0
          %475 = vmatpush1.msra.mxu0 0.0
          %476 = vmatprep.subr.mxu0 0.0
          %477 = vmatpush1.msra.mxu0 0.0
          %478 = vmatprep.subr.mxu0 0.0
          %479 = vmatpush1.msra.mxu0 0.0
          %480 = vmatprep.subr.mxu0 0.0
          %481 = vmatpush1.msra.mxu0 0.0
          %482 = vmatprep.subr.mxu0 0.0
          %483 = vmatpush1.msra.mxu0 0.0
          %484 = vmatprep.subr.mxu0 0.0
          %485 = vmatpush1.msra.mxu0 0.0
          %486 = vmatprep.subr.mxu0 0.0
          %487 = vmatpush1.msra.mxu0 0.0
          %488 = vmatprep.subr.mxu0 0.0
          %489 = vmatpush1.msra.mxu0 0.0
          %490 = vmatprep.subr.mxu0 0.0
          %491 = vmatpush1.msra.mxu0 0.0
          %492 = vmatprep.subr.mxu0 0.0
          %493 = vmatpush1.msra.mxu0 0.0
          %494 = vmatprep.subr.mxu0 0.0
          %495 = vmatpush1.msra.mxu0 0.0
          %496 = vmatprep.subr.mxu0 0.0
          %497 = vmatpush1.msra.mxu0 0.0
          %498 = vmatprep.subr.mxu0 0.0
          %499 = vmatpush1.msra.mxu0 0.0
          %500 = vmatprep.subr.mxu0 0.0
          %501 = vmatpush1.msra.mxu0 0.0
          %502 = vmatprep.subr.mxu0 0.0
          %503 = vmatpush1.msra.mxu0 0.0
          %504 = vmatprep.subr.mxu0 0.0
          %505 = vmatpush1.msra.mxu0 0.0
          %506 = vmatprep.subr.mxu0 0.0
          %507 = vmatpush1.msra.mxu0 0.0
          %508 = vmatprep.subr.mxu0 0.0
          %509 = vmatpush1.msra.mxu0 0.0
          %510 = vmatprep.subr.mxu0 0.0
          %511 = vmatpush1.msra.mxu0 0.0
          %512 = vmatprep.mubr.f32.mxu0 0.0
          %513 = vmatmul.mubr.f32.gmra.mrb[0].mxu0 %v446
          %v514 = vpop.f32.mrb[0].mxu0
          %v515 = vadd.f32 %v443, %v514
          %v516 = vpop.f32.mrb[0].mxu0
          %517 = vdwg.mxu0
          %v518 = vxor.u32 %v515, 2147483648
          %v519 = vmul.f32 %v518, 1.442695
          %v520 = vpow.pop %v519
          %v521 = vadd.f32 %v520, 1.0
          %v522 = vrcp.pop %v521
          %v523 = vmul.f32 1.0, %v522
          %v524 = vmul.f32 %v523, %v324
          %v525 = vmul.f32 %v432, %v433
          %vm526 = vcmask 519168
          %v527 = vsel %vm526, %v524, 0.0
          %v528 = vrot.slane %v527, 4
          %v529 = vadd.f32 %v527, %v528
          %v530 = vrot.slane %v529, 2
          %v531 = vadd.f32 %v529, %v530
          %v532 = vrot.slane %v531, 1
          %v533 = vadd.f32 %v531, %v532
          %v534 = vadd.f32 %v525, %v533
          %v535 = vtanh.pop %v534
          %537 = vrot.lane.b32.xlu0 %v535, 64
          %v538 = vpop.permute.xlu0 %537
          %v540 = vmul.f32 %v432, %v538
          %v541 = vsel %vm445, %v534, %v540
          %s542 = scalar_lea.vmem %s258, %s303
          %543 = vst [vmem:[%s542] sm:$0x1] %v541
        $region53: #{tpu_custom_call.1} parent=35 // loop_footer
          %s299 = sadd.s32 %s297, 1
        $region54: #{tpu_custom_call.1} parent=35 // loop_footer_branch
          %296 = sbr.rel target = $region50
        $region55: #{tpu_custom_call.1} parent=35 // loop_exit
          _
        %p544 = scmp.lt.s32.totalorder %s34, 1
        %s545 = scalar_select %p544, %s34, 1
        %s546 = smul.addr %s545, 2
        %s547 = smul.addr %s546, 8
        %s548 = scalar_lea.vmem %s7, %s547
        // Predicated region
        $region56: #{tpu_custom_call.1} parent=35 // pred_check
          %p549 = pneg %p141
        $region57: #{tpu_custom_call.1} parent=35 // pred_check_branch
          %551 = sbr.rel (%p549) target = $region59
        $region58: #{tpu_custom_call.1} parent=35 // pred_region
          _
        $region59: #{tpu_custom_call.1} parent=35 // pred_fallthru
          _
      $region36: #{tpu_custom_call.1} parent=5 // pred_fallthru
        _
      %p552 = scmp.le.s32.totalorder 2, %s29
      // Predicated region
      $region60: #{tpu_custom_call.1} parent=5 // pred_check
        %p553 = pneg %p552
      $region61: #{tpu_custom_call.1} parent=5 // pred_check_branch
        %555 = sbr.rel (%p553) target = $region63
      $region62: #{tpu_custom_call.1} parent=5 // pred_region
        %s556 = ssub.s32 %s29, 2
        // Predicated region
        $region64: #{tpu_custom_call.1} parent=62 // pred_check
          %p557 = pneg %p147
        $region65: #{tpu_custom_call.1} parent=62 // pred_check_branch
          %559 = sbr.rel (%p557) target = $region67
        $region66: #{tpu_custom_call.1} parent=62 // pred_region
          %p560 = scmp.lt.s32.totalorder %s35, 1
          %s561 = scalar_select %p560, %s35, 1
          %s562 = smul.addr %s561, 2
          %s563 = smul.addr %s562, 8
          %s564 = scalar_lea.vmem %s7, %s563
        $region67: #{tpu_custom_call.1} parent=62 // pred_fallthru
          _
      $region63: #{tpu_custom_call.1} parent=5 // pred_fallthru
        _
    $region6: #{tpu_custom_call.1} parent=1 // loop_footer
      %s33 = sadd.s32 1, %s29
    $region7: #{tpu_custom_call.1} parent=1 // loop_footer_branch
      %28 = sbr.rel target = $region3
    $region8: #{tpu_custom_call.1} parent=1 // loop_exit
      _
    %565 = vsyncpa [#allocation8], 1
    %s566 = scalar_lea.sflag [#allocation8], 1
    %567 = vsyncpa %s566, 1
    %568 = vsyncpa [#allocation10], 1

</llo_original>
